<compile_context>
chip_gen: v6e
topology: v6e:2x2x1
jax: 0.10.0
libtpu: 0.0.40
codegen_flags: <defaults>
</compile_context>

<pallas_src>
import functools

import jax
import jax.numpy as jnp
from jax.experimental import pallas as pl
from jax.experimental.pallas import tpu as pltpu

NUM_TARGETS = 2
IN_FEATURES = 14 * 14 * 2   # 392
IN_PAD = 512                # padded to a lane (128) multiple
H1, H2 = 64, 32

SELU_ALPHA = 1.6732632423543772
SELU_SCALE = 1.0507009873554805
BN_EPS = 1e-5

MAX_TILE_B = 2048           # batch-tile rows; ~9 MiB double-buffered VMEM


def _selu(x):
    return SELU_SCALE * jnp.where(x > 0, x, SELU_ALPHA * (jnp.exp(x) - 1.0))


def _round_up(a, b):
    return (a + b - 1) // b * b


def _row_mask(tb, n_valid):
    """(tb, 1) bool: which rows of this tile are real (non-padded) rows."""
    rows = pl.program_id(0) * tb + jax.lax.broadcasted_iota(jnp.int32, (tb, 1), 0)
    return rows < n_valid


def _partial_stats(h, mask):
    """Per-tile [sum, sumsq] over valid rows of h: (2, F)."""
    hm = jnp.where(mask, h, 0.0)
    s = jnp.sum(hm, axis=0, keepdims=True)
    ss = jnp.sum(hm * hm, axis=0, keepdims=True)
    return jnp.concatenate([s, ss], axis=0)


# ---- Pass 1: h1_pre = SELU(x @ W1 + b1); per-tile BN1 partial stats -----------
def _pass1_kernel(x_ref, w1_ref, b1_ref, h1_ref, st_ref, *, tb, n_valid):
    h = _selu(jnp.dot(x_ref[...], w1_ref[...],
                      preferred_element_type=jnp.float32) + b1_ref[...])
    h1_ref[...] = h
    st_ref[...] = _partial_stats(h, _row_mask(tb, n_valid))[None]


# ---- Pass 2: apply BN1 (scale/shift), h2_pre = SELU(. @ W2 + b2); BN2 stats ---
def _pass2_kernel(h1_ref, sc1_ref, sh1_ref, w2_ref, b2_ref, h2_ref, st_ref,
                  *, tb, n_valid):
    a1 = h1_ref[...] * sc1_ref[...] + sh1_ref[...]
    h = _selu(jnp.dot(a1, w2_ref[...],
                      preferred_element_type=jnp.float32) + b2_ref[...])
    h2_ref[...] = h
    st_ref[...] = _partial_stats(h, _row_mask(tb, n_valid))[None]


# ---- Pass 3: apply BN2 (scale/shift), logits = . @ W3 + b3 --------------------
def _pass3_kernel(h2_ref, sc2_ref, sh2_ref, w3_ref, b3_ref, out_ref):
    a2 = h2_ref[...] * sc2_ref[...] + sh2_ref[...]
    out_ref[...] = jnp.dot(a2, w3_ref[...],
                           preferred_element_type=jnp.float32) + b3_ref[...]


def _bn_affine(partial_stats, n, gamma, beta):
    """Reduce per-tile [sum, sumsq] partials -> per-feature scale/shift (1, F)."""
    tot = jnp.sum(partial_stats, axis=0)                # (2, F)
    mean = tot[0] / n
    var = jnp.maximum(tot[1] / n - mean * mean, 0.0)    # biased variance
    scale = gamma * jax.lax.rsqrt(var + BN_EPS)         # (1, F)
    shift = beta - mean * scale                         # (1, F)
    return scale, shift


def init_params(key):
    """Deterministic init mimicking PyTorch Linear default (uniform ±1/sqrt(fan_in))."""
    def linear(key, fan_in, fan_out):
        k1, k2 = jax.random.split(key)
        bound = 1.0 / jnp.sqrt(fan_in)
        w = jax.random.uniform(k1, (fan_in, fan_out), jnp.float32, -bound, bound)
        b = jax.random.uniform(k2, (1, fan_out), jnp.float32, -bound, bound)
        return w, b

    k1, k2, k3 = jax.random.split(key, 3)
    w1, b1 = linear(k1, IN_FEATURES, H1)
    w2, b2 = linear(k2, H1, H2)
    w3, b3 = linear(k3, H2, NUM_TARGETS)
    g1, be1 = jnp.ones((1, H1), jnp.float32), jnp.zeros((1, H1), jnp.float32)
    g2, be2 = jnp.ones((1, H2), jnp.float32), jnp.zeros((1, H2), jnp.float32)
    return (w1, b1, g1, be1, w2, b2, g2, be2, w3, b3)


def mlp_forward(x, params, tile_b=None):
    (w1, b1, g1, be1, w2, b2, g2, be2, w3, b3) = params
    n = x.shape[0]
    x_flat = x.reshape(n, -1).astype(jnp.float32)   # nn.Flatten order (NCHW)

    tb = _round_up(min(tile_b or MAX_TILE_B, _round_up(n, 8)), 8)
    n_pad = _round_up(n, tb)
    nt = n_pad // tb

    # Pad batch rows (zeros; masked out of BN stats) and features 392 -> 512.
    x_pad = jnp.pad(x_flat, ((0, n_pad - n), (0, IN_PAD - IN_FEATURES)))
    w1_pad = jnp.pad(w1, ((0, IN_PAD - IN_FEATURES), (0, 0)))

    cparams = pltpu.CompilerParams(
        dimension_semantics=("parallel",),
        vmem_limit_bytes=32 * 1024 * 1024,
    )

    def row_blk(f):
        return pl.BlockSpec((tb, f), lambda i: (i, 0))

    def rep(shape):
        # Constant block index across the grid -> weight/bias stays VMEM-resident.
        return pl.BlockSpec(shape, lambda i: (0, 0))

    def st_blk(f):
        return pl.BlockSpec((1, 2, f), lambda i: (i, 0, 0))

    # ---- Pass 1 ----
    h1_pre, st1 = pl.pallas_call(
        functools.partial(_pass1_kernel, tb=tb, n_valid=n),
        grid=(nt,),
        in_specs=[row_blk(IN_PAD), rep((IN_PAD, H1)), rep((1, H1))],
        out_specs=(row_blk(H1), st_blk(H1)),
        out_shape=(jax.ShapeDtypeStruct((n_pad, H1), jnp.float32),
                   jax.ShapeDtypeStruct((nt, 2, H1), jnp.float32)),
        compiler_params=cparams,
        cost_estimate=pl.CostEstimate(
            flops=2 * n_pad * IN_PAD * H1,
            transcendentals=n_pad * H1,
            bytes_accessed=4 * (n_pad * IN_PAD + n_pad * H1 + IN_PAD * H1)),
    )(x_pad, w1_pad, b1)

    sc1, sh1 = _bn_affine(st1, n, g1, be1)

    # ---- Pass 2 ----
    h2_pre, st2 = pl.pallas_call(
        functools.partial(_pass2_kernel, tb=tb, n_valid=n),
        grid=(nt,),
        in_specs=[row_blk(H1), rep((1, H1)), rep((1, H1)),
                  rep((H1, H2)), rep((1, H2))],
        out_specs=(row_blk(H2), st_blk(H2)),
        out_shape=(jax.ShapeDtypeStruct((n_pad, H2), jnp.float32),
                   jax.ShapeDtypeStruct((nt, 2, H2), jnp.float32)),
        compiler_params=cparams,
        cost_estimate=pl.CostEstimate(
            flops=2 * n_pad * H1 * H2,
            transcendentals=n_pad * H2,
            bytes_accessed=4 * (n_pad * H1 + n_pad * H2 + H1 * H2)),
    )(h1_pre, sc1, sh1, w2, b2)

    sc2, sh2 = _bn_affine(st2, n, g2, be2)

    # ---- Pass 3 ----
    logits_pad = pl.pallas_call(
        _pass3_kernel,
        grid=(nt,),
        in_specs=[row_blk(H2), rep((1, H2)), rep((1, H2)),
                  rep((H2, NUM_TARGETS)), rep((1, NUM_TARGETS))],
        out_specs=row_blk(NUM_TARGETS),
        out_shape=jax.ShapeDtypeStruct((n_pad, NUM_TARGETS), jnp.float32),
        compiler_params=cparams,
        cost_estimate=pl.CostEstimate(
            flops=2 * n_pad * H2 * NUM_TARGETS,
            transcendentals=0,
            bytes_accessed=4 * (n_pad * H2 + n_pad * NUM_TARGETS
                                + H2 * NUM_TARGETS)),
    )(h2_pre, sc2, sh2, w3, b3)

    logits = logits_pad[:n]
    # 2-class argmax computed from the kernel logits (first-max tie rule).
    predicted = jnp.argmax(logits, axis=1).astype(jnp.int32)
    return predicted, logits


def mlp_reference(x, params):
    """Pure-JAX reference matching the PyTorch forward (BN in training mode)."""
    (w1, b1, g1, be1, w2, b2, g2, be2, w3, b3) = params

    def bn(h, gamma, beta):
        mean = jnp.mean(h, axis=0, keepdims=True)
        var = jnp.mean((h - mean) ** 2, axis=0, keepdims=True)
        return gamma * (h - mean) * jax.lax.rsqrt(var + BN_EPS) + beta

    h = x.reshape(x.shape[0], -1).astype(jnp.float32)
    h = bn(_selu(h @ w1 + b1), g1, be1)
    h = bn(_selu(h @ w2 + b2), g2, be2)
    logits = h @ w3 + b3
    return jnp.argmax(logits, axis=1).astype(jnp.int32), logits


if __name__ == "__main__":
    key = jax.random.PRNGKey(0)
    kx, kx2, kp = jax.random.split(key, 3)
    params = init_params(kp)

    # Case 1: small batch (single tile).
    N = 8
    x = jax.random.normal(kx, (N, 2, 14, 14), jnp.float32)   # NCHW, like PyTorch
    predicted, out = mlp_forward(x, params)
    jax.block_until_ready((predicted, out))
    ref_pred, ref_out = mlp_reference(x, params)
    assert out.shape == (N, NUM_TARGETS) and predicted.shape == (N,)
    assert jnp.allclose(out, ref_out, atol=1e-4, rtol=1e-4)
    assert jnp.array_equal(predicted, ref_pred)

    # Case 2: multi-tile path with padded rows (tile_b=8 -> 3 tiles, 4 pad rows),
    # exercising the streaming full-batch BatchNorm statistics.
    N2 = 20
    x2 = jax.random.normal(kx2, (N2, 2, 14, 14), jnp.float32)
    predicted2, out2 = mlp_forward(x2, params, tile_b=8)
    jax.block_until_ready((predicted2, out2))
    ref_pred2, ref_out2 = mlp_reference(x2, params)
    assert out2.shape == (N2, NUM_TARGETS) and predicted2.shape == (N2,)
    assert jnp.allclose(out2, ref_out2, atol=1e-4, rtol=1e-4)
    assert jnp.array_equal(predicted2, ref_pred2)

    print("KERNEL_OK")
</pallas_src>

<mosaic_0001>
module attributes {stable_mosaic.version = 11 : i64} {
  func.func @_pass1_kernel(%arg0: i32, %arg1: memref<8x512xf32, #tpu.memory_space<vmem>>, %arg2: memref<512x64xf32, #tpu.memory_space<vmem>>, %arg3: memref<1x64xf32, #tpu.memory_space<vmem>>, %arg4: memref<8x64xf32, #tpu.memory_space<vmem>>, %arg5: memref<1x2x64xf32, #tpu.memory_space<vmem>>) attributes {dimension_semantics = [#tpu.dimension_semantics<parallel>], iteration_bounds = array<i64: 1>, scalar_prefetch = 0 : i64, scratch_operands = 0 : i64, tpu.core_type = #tpu.core_type<tc>, window_params = [{transform_indices = @transform_0, window_bounds = array<i64: 8, 512>}, {pipeline_mode = #tpu.pipeline_mode<synchronous>, transform_indices = @transform_1, window_bounds = array<i64: 512, 64>}, {pipeline_mode = #tpu.pipeline_mode<synchronous>, transform_indices = @transform_2, window_bounds = array<i64: 1, 64>}, {transform_indices = @transform_3, window_bounds = array<i64: 8, 64>}, {transform_indices = @transform_4, window_bounds = array<i64: 1, 2, 64>}]} {
    %c0 = arith.constant 0 : index
    %c0_0 = arith.constant 0 : index
    %0 = vector.load %arg1[%c0, %c0_0] : memref<8x512xf32, #tpu.memory_space<vmem>>, vector<8x512xf32>
    %c0_1 = arith.constant 0 : index
    %c0_2 = arith.constant 0 : index
    %1 = vector.load %arg2[%c0_1, %c0_2] : memref<512x64xf32, #tpu.memory_space<vmem>>, vector<512x64xf32>
    %cst = arith.constant dense<0.000000e+00> : vector<8x64xf32>
    %2 = tpu.matmul %0, %1, %cst {dimension_numbers = #tpu.dot_dimension_numbers<[1], [0], [0], [1], [0, 0, 1, 1], [], []>} : vector<8x512xf32>, vector<512x64xf32>, vector<8x64xf32> -> vector<8x64xf32>
    %c0_3 = arith.constant 0 : index
    %c0_4 = arith.constant 0 : index
    %3 = vector.load %arg3[%c0_3, %c0_4] : memref<1x64xf32, #tpu.memory_space<vmem>>, vector<1x64xf32>
    %4 = vector.broadcast %3 : vector<1x64xf32> to vector<8x64xf32>
    %5 = arith.addf %2, %4 : vector<8x64xf32>
    %cst_5 = arith.constant 0.000000e+00 : f32
    %6 = vector.broadcast %cst_5 : f32 to vector<8x64xf32>
    %7 = arith.cmpf ogt, %5, %6 : vector<8x64xf32>
    %8 = math.exp %5 : vector<8x64xf32>
    %cst_6 = arith.constant 1.000000e+00 : f32
    %9 = vector.broadcast %cst_6 : f32 to vector<8x64xf32>
    %10 = arith.subf %8, %9 : vector<8x64xf32>
    %cst_7 = arith.constant 1.67326319 : f32
    %11 = vector.broadcast %cst_7 : f32 to vector<8x64xf32>
    %12 = arith.mulf %11, %10 : vector<8x64xf32>
    %13 = arith.select %7, %5, %12 : vector<8x64xi1>, vector<8x64xf32>
    %cst_8 = arith.constant 1.05070102 : f32
    %14 = vector.broadcast %cst_8 : f32 to vector<8x64xf32>
    %15 = arith.mulf %14, %13 : vector<8x64xf32>
    %c0_9 = arith.constant 0 : index
    %c0_10 = arith.constant 0 : index
    %16 = vector.load %arg4[%c0_9, %c0_10] : memref<8x64xf32, #tpu.memory_space<vmem>>, vector<8x64xf32>
    tpu.vector_store %arg4[%c0_9, %c0_10], %15 {strides = array<i32>} : memref<8x64xf32, #tpu.memory_space<vmem>>, vector<8x64xf32>,
    %c8_i32 = arith.constant 8 : i32
    %17 = arith.muli %arg0, %c8_i32 : i32
    %18 = tpu.iota {dimensions = array<i32: 0>} : vector<8x1xi32>
    %19 = vector.broadcast %17 : i32 to vector<8x1xi32>
    %20 = arith.addi %19, %18 : vector<8x1xi32>
    %c8_i32_11 = arith.constant 8 : i32
    %21 = vector.broadcast %c8_i32_11 : i32 to vector<8x1xi32>
    %22 = arith.cmpi slt, %20, %21 : vector<8x1xi32>
    %cst_12 = arith.constant 0.000000e+00 : f32
    %23 = vector.shape_cast %22 : vector<8x1xi1> to vector<8x1xi1>
    %24 = vector.broadcast %23 : vector<8x1xi1> to vector<8x64xi1>
    %25 = vector.broadcast %cst_12 : f32 to vector<8x64xf32>
    %26 = arith.select %24, %15, %25 : vector<8x64xi1>, vector<8x64xf32>
    %cst_13 = arith.constant dense<0.000000e+00> : vector<64xf32>
    %27 = vector.multi_reduction <add>, %26, %cst_13 [0] : vector<8x64xf32> to vector<64xf32>
    %28 = vector.shape_cast %27 : vector<64xf32> to vector<1x64xf32>
    %29 = arith.mulf %26, %26 : vector<8x64xf32>
    %cst_14 = arith.constant dense<0.000000e+00> : vector<64xf32>
    %30 = vector.multi_reduction <add>, %29, %cst_14 [0] : vector<8x64xf32> to vector<64xf32>
    %31 = vector.shape_cast %30 : vector<64xf32> to vector<1x64xf32>
    %32 = tpu.concatenate %28, %31 in 0 : vector<1x64xf32>, vector<1x64xf32> -> vector<2x64xf32>
    %33 = vector.shape_cast %32 : vector<2x64xf32> to vector<1x2x64xf32>
    %c0_15 = arith.constant 0 : index
    %c0_16 = arith.constant 0 : index
    %c0_17 = arith.constant 0 : index
    %34 = vector.load %arg5[%c0_15, %c0_16, %c0_17] : memref<1x2x64xf32, #tpu.memory_space<vmem>>, vector<1x2x64xf32>
    tpu.vector_store %arg5[%c0_15, %c0_16, %c0_17], %33 {strides = array<i32>} : memref<1x2x64xf32, #tpu.memory_space<vmem>>, vector<1x2x64xf32>,
    return
  }
  func.func @transform_0(%arg0: i32) -> (i32, i32) {
    %c0_i32 = arith.constant 0 : i32
    %c0_i32_0 = arith.constant 0 : i32
    return %arg0, %c0_i32 : i32, i32
  }
  func.func @transform_1(%arg0: i32) -> (i32, i32) {
    %c0_i32 = arith.constant 0 : i32
    %c0_i32_0 = arith.constant 0 : i32
    %c0_i32_1 = arith.constant 0 : i32
    return %c0_i32, %c0_i32_0 : i32, i32
  }
  func.func @transform_2(%arg0: i32) -> (i32, i32) {
    %c0_i32 = arith.constant 0 : i32
    %c0_i32_0 = arith.constant 0 : i32
    %c0_i32_1 = arith.constant 0 : i32
    return %c0_i32, %c0_i32_0 : i32, i32
  }
  func.func @transform_3(%arg0: i32) -> (i32, i32) {
    %c0_i32 = arith.constant 0 : i32
    %c0_i32_0 = arith.constant 0 : i32
    return %arg0, %c0_i32 : i32, i32
  }
  func.func @transform_4(%arg0: i32) -> (i32, i32, i32) {
    %c0_i32 = arith.constant 0 : i32
    %c0_i32_0 = arith.constant 0 : i32
    %c0_i32_1 = arith.constant 0 : i32
    return %arg0, %c0_i32, %c0_i32_0 : i32, i32, i32
  }
}

</mosaic_0001>

<llo_original>
// kernel: tpu_custom_call.1
$region0: #{tpu_custom_call.1}
  #allocation0 [shape = 'u32[]', space=smem, size = 0x4, offset = 0x4, fixed_abs, tag = 'smem constant byte address 0x4 - core index']
  #allocation1 [shape = 'u32[144,128]{1,0:T(1,128)}', space=vmem, size = 0x12000, scoped, tag = 'internal scratch']
  %s0 = inlined_call_operand.vmem [shape: f32[8,512], index: 0, kind: input, shape index: {}]
  %s1 = inlined_call_operand.vmem [shape: f32[512,64], index: 1, kind: input, shape index: {}]
  %s2 = inlined_call_operand.vmem [shape: f32[1,64], index: 2, kind: input, shape index: {}]
  %s3 = inlined_call_operand.hbm [shape: f32[8,64], index: 3, kind: output, shape index: {0}]
  %s4 = inlined_call_operand.hbm [shape: f32[1,2,64], index: 4, kind: output, shape index: {1}]
  %5 = xla_tuple %s3, %s4
  %s6 = sld [smem:[#allocation0]]
  $region30: #{tpu_custom_call.1} parent=0
    _
  %s8 = ssub.s32 1, %s6
  %s9 = scalar_select 0, %s8, %s6
  $region1: #{tpu_custom_call.1} parent=0
    #allocation2 [shape = 'u8[4096]{0}', space=vmem, size = 0x1000, scoped, tag = 'output window, operand 0, single buffered']
    #allocation3 [shape = 's32[1]{0}', space=sflag, size = 0x4, scoped, tag = 'scoped memory for tpu_custom_call.1']
    #allocation4 [shape = 'u8[1024]{0}', space=vmem, size = 0x400, scoped, tag = 'output window, operand 1, single buffered']
    #allocation5 [shape = 's32[1]{0}', space=sflag, size = 0x4, scoped, tag = 'scoped memory for tpu_custom_call.1']
    %10 = vsyncpa [#allocation3], 0
    %11 = vsyncpa [#allocation5], 0
    // Predicated region
    $region2: #{tpu_custom_call.1} parent=1 // pred_check
      _
    $region3: #{tpu_custom_call.1} parent=1 // pred_check_branch
      %13 = sbr.rel (0) target = $region5
    $region4: #{tpu_custom_call.1} parent=1 // pred_region
      _
    $region5: #{tpu_custom_call.1} parent=1 // pred_fallthru
      _
    // Predicated region
    $region6: #{tpu_custom_call.1} parent=1 // pred_check
      _
    $region7: #{tpu_custom_call.1} parent=1 // pred_check_branch
      %15 = sbr.rel (0) target = $region9
    $region8: #{tpu_custom_call.1} parent=1 // pred_region
      _
    $region9: #{tpu_custom_call.1} parent=1 // pred_fallthru
      _
    // Predicated region
    $region10: #{tpu_custom_call.1} parent=1 // pred_check
      _
    $region11: #{tpu_custom_call.1} parent=1 // pred_check_branch
      %17 = sbr.rel (0) target = $region13
    $region12: #{tpu_custom_call.1} parent=1 // pred_region
      _
    $region13: #{tpu_custom_call.1} parent=1 // pred_fallthru
      _
    %v18 = vld [vmem:[%s0] sm:$0xff]
    %v19 = vld [vmem:[%s0 + $0x8] sm:$0xff]
    %v20 = vld [vmem:[%s0 + $0x10] sm:$0xff]
    %v21 = vld [vmem:[%s0 + $0x18] sm:$0xff]
    %v22 = vld [vmem:[%s1] sm:$0xff]
    %v23 = vld [vmem:[%s1 + $0x8] sm:$0xff]
    %v24 = vld [vmem:[%s1 + $0x10] sm:$0xff]
    %v25 = vld [vmem:[%s1 + $0x18] sm:$0xff]
    %v26 = vld [vmem:[%s1 + $0x20] sm:$0xff]
    %v27 = vld [vmem:[%s1 + $0x28] sm:$0xff]
    %v28 = vld [vmem:[%s1 + $0x30] sm:$0xff]
    %v29 = vld [vmem:[%s1 + $0x38] sm:$0xff]
    %v30 = vld [vmem:[%s1 + $0x40] sm:$0xff]
    %v31 = vld [vmem:[%s1 + $0x48] sm:$0xff]
    %v32 = vld [vmem:[%s1 + $0x50] sm:$0xff]
    %v33 = vld [vmem:[%s1 + $0x58] sm:$0xff]
    %v34 = vld [vmem:[%s1 + $0x60] sm:$0xff]
    %v35 = vld [vmem:[%s1 + $0x68] sm:$0xff]
    %v36 = vld [vmem:[%s1 + $0x70] sm:$0xff]
    %v37 = vld [vmem:[%s1 + $0x78] sm:$0xff]
    %v38 = vld [vmem:[%s1 + $0x80] sm:$0xff]
    %v39 = vld [vmem:[%s1 + $0x88] sm:$0xff]
    %v40 = vld [vmem:[%s1 + $0x90] sm:$0xff]
    %v41 = vld [vmem:[%s1 + $0x98] sm:$0xff]
    %v42 = vld [vmem:[%s1 + $0xa0] sm:$0xff]
    %v43 = vld [vmem:[%s1 + $0xa8] sm:$0xff]
    %v44 = vld [vmem:[%s1 + $0xb0] sm:$0xff]
    %v45 = vld [vmem:[%s1 + $0xb8] sm:$0xff]
    %v46 = vld [vmem:[%s1 + $0xc0] sm:$0xff]
    %v47 = vld [vmem:[%s1 + $0xc8] sm:$0xff]
    %v48 = vld [vmem:[%s1 + $0xd0] sm:$0xff]
    %v49 = vld [vmem:[%s1 + $0xd8] sm:$0xff]
    %v50 = vld [vmem:[%s1 + $0xe0] sm:$0xff]
    %v51 = vld [vmem:[%s1 + $0xe8] sm:$0xff]
    %v52 = vld [vmem:[%s1 + $0xf0] sm:$0xff]
    %v53 = vld [vmem:[%s1 + $0xf8] sm:$0xff]
    %v54 = vld [vmem:[%s1 + $0x100] sm:$0xff]
    %v55 = vld [vmem:[%s1 + $0x108] sm:$0xff]
    %v56 = vld [vmem:[%s1 + $0x110] sm:$0xff]
    %v57 = vld [vmem:[%s1 + $0x118] sm:$0xff]
    %v58 = vld [vmem:[%s1 + $0x120] sm:$0xff]
    %v59 = vld [vmem:[%s1 + $0x128] sm:$0xff]
    %v60 = vld [vmem:[%s1 + $0x130] sm:$0xff]
    %v61 = vld [vmem:[%s1 + $0x138] sm:$0xff]
    %v62 = vld [vmem:[%s1 + $0x140] sm:$0xff]
    %v63 = vld [vmem:[%s1 + $0x148] sm:$0xff]
    %v64 = vld [vmem:[%s1 + $0x150] sm:$0xff]
    %v65 = vld [vmem:[%s1 + $0x158] sm:$0xff]
    %v66 = vld [vmem:[%s1 + $0x160] sm:$0xff]
    %v67 = vld [vmem:[%s1 + $0x168] sm:$0xff]
    %v68 = vld [vmem:[%s1 + $0x170] sm:$0xff]
    %v69 = vld [vmem:[%s1 + $0x178] sm:$0xff]
    %v70 = vld [vmem:[%s1 + $0x180] sm:$0xff]
    %v71 = vld [vmem:[%s1 + $0x188] sm:$0xff]
    %v72 = vld [vmem:[%s1 + $0x190] sm:$0xff]
    %v73 = vld [vmem:[%s1 + $0x198] sm:$0xff]
    %v74 = vld [vmem:[%s1 + $0x1a0] sm:$0xff]
    %v75 = vld [vmem:[%s1 + $0x1a8] sm:$0xff]
    %v76 = vld [vmem:[%s1 + $0x1b0] sm:$0xff]
    %v77 = vld [vmem:[%s1 + $0x1b8] sm:$0xff]
    %v78 = vld [vmem:[%s1 + $0x1c0] sm:$0xff]
    %v79 = vld [vmem:[%s1 + $0x1c8] sm:$0xff]
    %v80 = vld [vmem:[%s1 + $0x1d0] sm:$0xff]
    %v81 = vld [vmem:[%s1 + $0x1d8] sm:$0xff]
    %v82 = vld [vmem:[%s1 + $0x1e0] sm:$0xff]
    %v83 = vld [vmem:[%s1 + $0x1e8] sm:$0xff]
    %v84 = vld [vmem:[%s1 + $0x1f0] sm:$0xff]
    %v85 = vld [vmem:[%s1 + $0x1f8] sm:$0xff]
    %v86 = vld [vmem:[%s2] sm:$0x1]
    %v88 = vlaneseq
    %v89 = vshrl.u32 %v88, 7
    %v90 = vsub.s32 0, %v89
    %v91 = vrot.slane %v86, %v90
    %93 = vmatprep.subr.mxu0 0.0
    %94 = vmatpush1.msra.mxu0 %v37
    %95 = vmatprep.subr.mxu0 0.0
    %96 = vmatpush1.msra.mxu0 %v36
    %97 = vmatprep.subr.mxu0 0.0
    %98 = vmatpush1.msra.mxu0 %v35
    %99 = vmatprep.subr.mxu0 0.0
    %100 = vmatpush1.msra.mxu0 %v34
    %101 = vmatprep.subr.mxu0 0.0
    %102 = vmatpush1.msra.mxu0 %v33
    %103 = vmatprep.subr.mxu0 0.0
    %104 = vmatpush1.msra.mxu0 %v32
    %105 = vmatprep.subr.mxu0 0.0
    %106 = vmatpush1.msra.mxu0 %v31
    %107 = vmatprep.subr.mxu0 0.0
    %108 = vmatpush1.msra.mxu0 %v30
    %109 = vmatprep.subr.mxu0 0.0
    %110 = vmatpush1.msra.mxu0 %v29
    %111 = vmatprep.subr.mxu0 0.0
    %112 = vmatpush1.msra.mxu0 %v28
    %113 = vmatprep.subr.mxu0 0.0
    %114 = vmatpush1.msra.mxu0 %v27
    %115 = vmatprep.subr.mxu0 0.0
    %116 = vmatpush1.msra.mxu0 %v26
    %117 = vmatprep.subr.mxu0 0.0
    %118 = vmatpush1.msra.mxu0 %v25
    %119 = vmatprep.subr.mxu0 0.0
    %120 = vmatpush1.msra.mxu0 %v24
    %121 = vmatprep.subr.mxu0 0.0
    %122 = vmatpush1.msra.mxu0 %v23
    %123 = vmatprep.subr.mxu0 0.0
    %124 = vmatpush1.msra.mxu0 %v22
    %125 = vmatprep.subr.mxu0 0.0
    %126 = vmatpush2.msra.mxu0 %v53
    %127 = vmatprep.subr.mxu0 0.0
    %128 = vmatpush2.msra.mxu0 %v52
    %129 = vmatprep.subr.mxu0 0.0
    %130 = vmatpush2.msra.mxu0 %v51
    %131 = vmatprep.subr.mxu0 0.0
    %132 = vmatpush2.msra.mxu0 %v50
    %133 = vmatprep.subr.mxu0 0.0
    %134 = vmatpush2.msra.mxu0 %v49
    %135 = vmatprep.subr.mxu0 0.0
    %136 = vmatpush2.msra.mxu0 %v48
    %137 = vmatprep.subr.mxu0 0.0
    %138 = vmatpush2.msra.mxu0 %v47
    %139 = vmatprep.subr.mxu0 0.0
    %140 = vmatpush2.msra.mxu0 %v46
    %141 = vmatprep.subr.mxu0 0.0
    %142 = vmatpush2.msra.mxu0 %v45
    %143 = vmatprep.subr.mxu0 0.0
    %144 = vmatpush2.msra.mxu0 %v44
    %145 = vmatprep.subr.mxu0 0.0
    %146 = vmatpush2.msra.mxu0 %v43
    %147 = vmatprep.subr.mxu0 0.0
    %148 = vmatpush2.msra.mxu0 %v42
    %149 = vmatprep.subr.mxu0 0.0
    %150 = vmatpush2.msra.mxu0 %v41
    %151 = vmatprep.subr.mxu0 0.0
    %152 = vmatpush2.msra.mxu0 %v40
    %153 = vmatprep.subr.mxu0 0.0
    %154 = vmatpush2.msra.mxu0 %v39
    %155 = vmatprep.subr.mxu0 0.0
    %156 = vmatpush2.msra.mxu0 %v38
    %157 = vmatprep.mubr.f32.mxu0 %v19
    %158 = vmatmul.mubr.f32.gmra.mxu0 %v18
    %v159 = vpop.f32.mrf.mxu0
    %v160 = vadd.f32 %v91, %v159
    %v161 = vpop.f32.mrf.mxu0
    %162 = vdwg.mxu0
    %163 = vmatprep.subr.mxu0 0.0
    %164 = vmatpush1.msra.mxu0 %v69
    %165 = vmatprep.subr.mxu0 0.0
    %166 = vmatpush1.msra.mxu0 %v68
    %167 = vmatprep.subr.mxu0 0.0
    %168 = vmatpush1.msra.mxu0 %v67
    %169 = vmatprep.subr.mxu0 0.0
    %170 = vmatpush1.msra.mxu0 %v66
    %171 = vmatprep.subr.mxu0 0.0
    %172 = vmatpush1.msra.mxu0 %v65
    %173 = vmatprep.subr.mxu0 0.0
    %174 = vmatpush1.msra.mxu0 %v64
    %175 = vmatprep.subr.mxu0 0.0
    %176 = vmatpush1.msra.mxu0 %v63
    %177 = vmatprep.subr.mxu0 0.0
    %178 = vmatpush1.msra.mxu0 %v62
    %179 = vmatprep.subr.mxu0 0.0
    %180 = vmatpush1.msra.mxu0 %v61
    %181 = vmatprep.subr.mxu0 0.0
    %182 = vmatpush1.msra.mxu0 %v60
    %183 = vmatprep.subr.mxu0 0.0
    %184 = vmatpush1.msra.mxu0 %v59
    %185 = vmatprep.subr.mxu0 0.0
    %186 = vmatpush1.msra.mxu0 %v58
    %187 = vmatprep.subr.mxu0 0.0
    %188 = vmatpush1.msra.mxu0 %v57
    %189 = vmatprep.subr.mxu0 0.0
    %190 = vmatpush1.msra.mxu0 %v56
    %191 = vmatprep.subr.mxu0 0.0
    %192 = vmatpush1.msra.mxu0 %v55
    %193 = vmatprep.subr.mxu0 0.0
    %194 = vmatpush1.msra.mxu0 %v54
    %195 = vmatprep.subr.mxu0 0.0
    %196 = vmatpush2.msra.mxu0 %v85
    %197 = vmatprep.subr.mxu0 0.0
    %198 = vmatpush2.msra.mxu0 %v84
    %199 = vmatprep.subr.mxu0 0.0
    %200 = vmatpush2.msra.mxu0 %v83
    %201 = vmatprep.subr.mxu0 0.0
    %202 = vmatpush2.msra.mxu0 %v82
    %203 = vmatprep.subr.mxu0 0.0
    %204 = vmatpush2.msra.mxu0 %v81
    %205 = vmatprep.subr.mxu0 0.0
    %206 = vmatpush2.msra.mxu0 %v80
    %207 = vmatprep.subr.mxu0 0.0
    %208 = vmatpush2.msra.mxu0 %v79
    %209 = vmatprep.subr.mxu0 0.0
    %210 = vmatpush2.msra.mxu0 %v78
    %211 = vmatprep.subr.mxu0 0.0
    %212 = vmatpush2.msra.mxu0 %v77
    %213 = vmatprep.subr.mxu0 0.0
    %214 = vmatpush2.msra.mxu0 %v76
    %215 = vmatprep.subr.mxu0 0.0
    %216 = vmatpush2.msra.mxu0 %v75
    %217 = vmatprep.subr.mxu0 0.0
    %218 = vmatpush2.msra.mxu0 %v74
    %219 = vmatprep.subr.mxu0 0.0
    %220 = vmatpush2.msra.mxu0 %v73
    %221 = vmatprep.subr.mxu0 0.0
    %222 = vmatpush2.msra.mxu0 %v72
    %223 = vmatprep.subr.mxu0 0.0
    %224 = vmatpush2.msra.mxu0 %v71
    %225 = vmatprep.subr.mxu0 0.0
    %226 = vmatpush2.msra.mxu0 %v70
    %227 = vmatprep.mubr.f32.mxu0 %v21
    %228 = vmatmul.mubr.f32.gmra.mxu0 %v20
    %v229 = vpop.f32.mrf.mxu0
    %v230 = vadd.f32 %v160, %v229
    %v231 = vpop.f32.mrf.mxu0
    %232 = vdwg.mxu0
    %vm233 = vcmp.gt.f32.partialorder %v230, 0.0
    %v234 = vmul.f32 %v230, 1.442695
    %v235 = vpow.pop %v234
    %v236 = vsub.f32 %v235, 1.0
    %v237 = vmul.f32 %v236, 1.6732632
    %v238 = vsel %vm233, %v230, %v237
    %v239 = vmul.f32 %v238, 1.050701
    %vm240 = vcmask 523264
    %241 = vst.msk [vmem:[#allocation2] sm:$0xff] %vm240, %v239
    %s242 = smul.u32 0, 8
    %v243 = vlaneseq
    %v244 = vshrl.u32 %v243, 7
    %v245 = vstv %s242
    %v246 = vadd.s32 %v245, %v244
    %vm247 = vcmp.lt.s32.totalorder %v246, 8
    %v248 = vsel %vm247, 1, 0
    %vm249 = vcmp.eq.s32.totalorder %v248, 1
    %v250 = vsel %vm249, %v239, 0.0
    %v251 = vsel %vm240, %v250, 0.0
    %v252 = vrot.slane %v251, 4
    %v253 = vadd.f32 %v251, %v252
    %v254 = vrot.slane %v253, 2
    %v255 = vadd.f32 %v253, %v254
    %v256 = vrot.slane %v255, 1
    %v257 = vadd.f32 %v255, %v256
    %v258 = vmul.f32 %v250, %v250
    %v259 = vsel %vm240, %v258, 0.0
    %v260 = vrot.slane %v259, 4
    %v261 = vadd.f32 %v259, %v260
    %v262 = vrot.slane %v261, 2
    %v263 = vadd.f32 %v261, %v262
    %v264 = vrot.slane %v263, 1
    %v265 = vadd.f32 %v263, %v264
    %vm266 = vcmask 1040384
    %v267 = vsel %vm266, %v257, %v265
    %vm268 = vcmask 517120
    %269 = vst.msk [vmem:[#allocation4] sm:$0x3] %vm268, %v267
    // Predicated region
    $region14: #{tpu_custom_call.1} parent=1 // pred_check
      _
    $region15: #{tpu_custom_call.1} parent=1 // pred_check_branch
      %271 = sbr.rel (0) target = $region17
    $region16: #{tpu_custom_call.1} parent=1 // pred_region
      %s273 = ssub.s32 128, 128
      %274 = vsyncadd [#allocation3], %s273
      %s276 = sshll.u32 [#allocation2], 4
      %s277 = int_to_ptr.vmem [resolvable:$true] %s276
      %279 = dma.vmem_to_hbm [thread:$0]  %s277, 128, %s3, [#allocation3]
    $region17: #{tpu_custom_call.1} parent=1 // pred_fallthru
      _
    // Predicated region
    $region18: #{tpu_custom_call.1} parent=1 // pred_check
      _
    $region19: #{tpu_custom_call.1} parent=1 // pred_check_branch
      %281 = sbr.rel (0) target = $region21
    $region20: #{tpu_custom_call.1} parent=1 // pred_region
      %s283 = ssub.s32 32, 32
      %284 = vsyncadd [#allocation5], %s283
      %s286 = sshll.u32 [#allocation4], 4
      %s287 = int_to_ptr.vmem [resolvable:$true] %s286
      %289 = dma.vmem_to_hbm [thread:$0]  %s287, 32, %s4, [#allocation5]
    $region21: #{tpu_custom_call.1} parent=1 // pred_fallthru
      _
    // Predicated region
    $region22: #{tpu_custom_call.1} parent=1 // pred_check
      _
    $region23: #{tpu_custom_call.1} parent=1 // pred_check_branch
      %291 = sbr.rel (0) target = $region25
    $region24: #{tpu_custom_call.1} parent=1 // pred_region
      %292 = dma.done [#allocation3], 128
    $region25: #{tpu_custom_call.1} parent=1 // pred_fallthru
      _
    // Predicated region
    $region26: #{tpu_custom_call.1} parent=1 // pred_check
      _
    $region27: #{tpu_custom_call.1} parent=1 // pred_check_branch
      %294 = sbr.rel (0) target = $region29
    $region28: #{tpu_custom_call.1} parent=1 // pred_region
      %295 = dma.done [#allocation5], 32
    $region29: #{tpu_custom_call.1} parent=1 // pred_fallthru
      _
    %296 = vsyncpa [#allocation3], 1
    %297 = vsyncpa [#allocation5], 1

</llo_original>
